<compile_context>
chip_gen: v7x
topology: tpu7x:2x2x1
jax: 0.10.0
libtpu: 0.0.40
codegen_flags: <defaults>
</compile_context>

<pallas_src>
import functools

import jax
import jax.numpy as jnp
import numpy as np
from jax import lax
from jax.experimental import pallas as pl
from jax.experimental.pallas import tpu as pltpu


def _lem_kernel(x_ref, o_ref, *, m, h, w):
    """x_ref / o_ref: (G, 5*H*W) — G channel groups; the last axis holds the 5
    shift-direction planes flattened row-major: (d, i, j) -> d*H*W + i*W + j."""
    hw = h * w

    def flat_roll(v, shift):
        # jnp.roll semantics along the flattened lane axis; shift normalized to
        # [0, hw) so pltpu.roll always sees a non-negative static amount.
        shift = shift % hw
        return v if shift == 0 else pltpu.roll(v, shift, axis=1)

    # --- W-shift directions: select between the row-interior and row-wrap ---
    # --- flat rolls based on the lane's column index j = lane % W.        ---
    x0 = x_ref[:, 0 * hw:1 * hw]                       # c%5==0: x[i, (j+m)%W]
    j = lax.broadcasted_iota(jnp.int32, x0.shape, 1) % w
    o_ref[:, 0 * hw:1 * hw] = jnp.where(
        j < w - m, flat_roll(x0, hw - m), flat_roll(x0, w - m))

    x1 = x_ref[:, 1 * hw:2 * hw]                       # c%5==1: x[i, (j-m)%W]
    o_ref[:, 1 * hw:2 * hw] = jnp.where(
        j >= m, flat_roll(x1, m), flat_roll(x1, hw - (w - m)))

    # --- H-shift directions: a flat roll by ±m*W is exactly the row roll. ---
    o_ref[:, 2 * hw:3 * hw] = flat_roll(x_ref[:, 2 * hw:3 * hw], hw - m * w)
    o_ref[:, 3 * hw:4 * hw] = flat_roll(x_ref[:, 3 * hw:4 * hw], m * w)

    # --- Identity direction. -------------------------------------------------
    o_ref[:, 4 * hw:5 * hw] = x_ref[:, 4 * hw:5 * hw]


def _vmem_budget():
    """(vmem_limit_bytes, per-block byte budget) derived from the chip."""
    phys = 128 * 1024 * 1024                           # v5e / v6e default
    try:
        info = pltpu.get_tpu_info()
        phys = int(getattr(info, "vmem_capacity_bytes", phys)) or phys
    except Exception:                                  # interpret mode, etc.
        pass
    phys = max(32 * 1024 * 1024, min(phys, 256 * 1024 * 1024))
    vmem_limit = (3 * phys) // 4                       # 96 MiB v5e/v6e, 48 MiB v7x
    block_budget = vmem_limit // 8                     # in+out double-buffered ~4x
    return vmem_limit, block_budget


def _pick_group_tile(groups, hw, itemsize, block_budget_bytes, batch):
    """Largest channel-group tile that (a) fits the per-block VMEM budget,
    (b) keeps the second-minor block dim 8-sublane aligned (or the full group
    extent), and (c) leaves >= 2 grid steps when batch == 1 (v7x 2nd core)."""
    bytes_per_group = 5 * hw * itemsize
    g_fit = min(groups, max(1, int(block_budget_bytes) // bytes_per_group))
    g_cap = g_fit if (batch > 1 or groups == 1) else min(g_fit, max(1, groups // 2))
    for g in range(g_cap, 0, -1):                      # aligned divisor under cap
        if groups % g == 0 and (g % 8 == 0 or g == groups):
            return g
    for g in range(g_fit, 0, -1):                      # drop the >=2-steps cap
        if groups % g == 0 and (g % 8 == 0 or g == groups):
            return g
    for g in range(g_fit, 0, -1):                      # last resort: any divisor
        if groups % g == 0:
            return g
    return groups


def make_lem_mask(planes: int, mix_margin: int = 1):
    """Deterministic mask exactly as in LEM.__init__ (requires planes % 5 == 0)."""
    assert planes % 5 == 0
    m = mix_margin
    K = 2 * m + 1
    mask = jnp.zeros((planes, 1, K, K), jnp.float32)
    mask = mask.at[3::5, 0, 0, m].set(1.0)
    mask = mask.at[2::5, 0, K - 1, m].set(1.0)
    mask = mask.at[1::5, 0, m, 0].set(1.0)
    mask = mask.at[0::5, 0, m, K - 1].set(1.0)
    mask = mask.at[4::5, 0, m, m].set(1.0)
    return mask


def lem_forward(x_nchw, mix_margin: int = 1, *, group_tile=None,
                mask=None, validate_mask=False):
    """LEM forward.  x_nchw: (N, C, H, W), same layout/dtype as the PyTorch
    module input.  The kernel is specialized to LEM's fixed one-hot mask; pass
    validate_mask=True (outside jit) to check a supplied mask against it."""
    N, C, H, W = x_nchw.shape
    m = int(mix_margin)
    assert C % 5 == 0, "LEM requires planes % 5 == 0"
    assert 1 <= m <= H and m <= W, "circular pad must not wrap more than once"

    if validate_mask and mask is not None:             # debug only: host sync
        expected = np.asarray(make_lem_mask(C, m))
        assert np.array_equal(np.asarray(jax.device_get(mask)), expected), \
            "lem_forward is specialized to the canonical LEM mask"

    groups = C // 5
    hw = H * W
    itemsize = jnp.dtype(x_nchw.dtype).itemsize
    vmem_limit, block_budget = _vmem_budget()
    if group_tile is None:
        group_tile = _pick_group_tile(groups, hw, itemsize, block_budget, N)
    assert groups % group_tile == 0

    # Free (contiguous) view: channel c = g*5 + d  ->  (g, d*H*W + i*W + j).
    x_flat = x_nchw.reshape(N, groups, 5 * hw)
    grid = (N, groups // group_tile)

    out_flat = pl.pallas_call(
        functools.partial(_lem_kernel, m=m, h=H, w=W),
        out_shape=jax.ShapeDtypeStruct((N, groups, 5 * hw), x_nchw.dtype),
        grid_spec=pltpu.PrefetchScalarGridSpec(
            num_scalar_prefetch=0,
            grid=grid,
            in_specs=[pl.BlockSpec((None, group_tile, 5 * hw),
                                   lambda n, g: (n, g, 0))],
            out_specs=pl.BlockSpec((None, group_tile, 5 * hw),
                                   lambda n, g: (n, g, 0)),
        ),
        compiler_params=pltpu.CompilerParams(
            dimension_semantics=("parallel", "parallel"),
            vmem_limit_bytes=vmem_limit,
        ),
        # If an xprof trace shows DMA gaps at block boundaries, add
        # pipeline_mode=pl.Buffered(3) to both BlockSpecs (kernel is streaming).
    )(x_flat)

    return out_flat.reshape(N, C, H, W)


def lem_reference(x_nchw, mask, mix_margin: int = 1):
    """Plain-JAX reference identical to the PyTorch forward (for verification)."""
    m = mix_margin
    x_pad = jnp.pad(x_nchw, ((0, 0), (0, 0), (m, m), (m, m)), mode="wrap")
    return lax.conv_general_dilated(
        x_pad, mask,
        window_strides=(1, 1), padding="VALID",
        dimension_numbers=("NCHW", "OIHW", "NCHW"),
        feature_group_count=x_nchw.shape[1])


if __name__ == "__main__":
    planes, N, H, W = 80, 2, 16, 16                    # planes % 5 == 0
    mix_margin = 1

    key = jax.random.PRNGKey(0)
    x = jax.random.normal(key, (N, planes, H, W), dtype=jnp.float32)

    # Pure-JAX reference == the PyTorch forward (circular pad + depthwise conv).
    mask = make_lem_mask(planes, mix_margin)
    ref = lem_reference(x, mask, mix_margin)

    # 1) Intended usage: jitted, auto-tiled (group_tile = 16 here -> grid (2,1)).
    out = jax.block_until_ready(jax.jit(lem_forward)(x))
    assert out.shape == ref.shape == (N, planes, H, W)
    assert jnp.allclose(out, ref, atol=1e-5, rtol=1e-5)

    # 2) Forced smaller (8-aligned) group tile: exercises the group grid axis.
    out2 = jax.block_until_ready(lem_forward(x, group_tile=8))
    assert jnp.allclose(out2, ref, atol=1e-5, rtol=1e-5)

    print("KERNEL_OK")
</pallas_src>

<mosaic_0001>
module attributes {stable_mosaic.version = 11 : i64} {
  func.func @_lem_kernel(%arg0: i32, %arg1: i32, %arg2: memref<1x16x1280xf32, #tpu.memory_space<vmem>>, %arg3: memref<1x16x1280xf32, #tpu.memory_space<vmem>>) attributes {dimension_semantics = [#tpu.dimension_semantics<parallel>, #tpu.dimension_semantics<parallel>], iteration_bounds = array<i64: 2, 1>, scalar_prefetch = 0 : i64, scratch_operands = 0 : i64, tpu.core_type = #tpu.core_type<tc>, window_params = [{transform_indices = @transform_0, window_bounds = array<i64: 1, 16, 1280>}, {transform_indices = @transform_1, window_bounds = array<i64: 1, 16, 1280>}]} {
    %c0 = arith.constant 0 : index
    %c0_0 = arith.constant 0 : index
    %c0_1 = arith.constant 0 : index
    %0 = vector.load %arg2[%c0, %c0_0, %c0_1] : memref<1x16x1280xf32, #tpu.memory_space<vmem>>, vector<1x16x256xf32>
    %1 = vector.shape_cast %0 : vector<1x16x256xf32> to vector<16x256xf32>
    %2 = tpu.iota {dimensions = array<i32: 1>} : vector<16x256xi32>
    %c16_i32 = arith.constant 16 : i32
    %c0_i32 = arith.constant 0 : i32
    %3 = arith.cmpi eq, %c16_i32, %c0_i32 : i32
    %c1_i32 = arith.constant 1 : i32
    %4 = arith.select %3, %c1_i32, %c16_i32 : i32
    %5 = vector.broadcast %4 : i32 to vector<16x256xi32>
    %6 = arith.remsi %2, %5 : vector<16x256xi32>
    %c0_i32_2 = arith.constant 0 : i32
    %7 = vector.broadcast %c0_i32_2 : i32 to vector<16x256xi32>
    %8 = arith.cmpi ne, %6, %7 : vector<16x256xi32>
    %c0_i32_3 = arith.constant 0 : i32
    %9 = vector.broadcast %c0_i32_3 : i32 to vector<16x256xi32>
    %10 = arith.cmpi slt, %6, %9 : vector<16x256xi32>
    %c0_i32_4 = arith.constant 0 : i32
    %11 = arith.cmpi slt, %4, %c0_i32_4 : i32
    %12 = vector.broadcast %11 : i1 to vector<16x256xi1>
    %13 = vector.broadcast %12 : vector<16x256xi1> to vector<16x256xi1>
    %14 = arith.xori %10, %13 : vector<16x256xi1>
    %15 = arith.andi %14, %8 : vector<16x256xi1>
    %16 = vector.broadcast %4 : i32 to vector<16x256xi32>
    %17 = arith.addi %6, %16 : vector<16x256xi32>
    %18 = arith.select %15, %17, %6 : vector<16x256xi1>, vector<16x256xi32>
    %c15_i32 = arith.constant 15 : i32
    %19 = vector.broadcast %c15_i32 : i32 to vector<16x256xi32>
    %20 = arith.cmpi slt, %18, %19 : vector<16x256xi32>
    %c255_i32 = arith.constant 255 : i32
    %21 = tpu.dynamic_rotate %1 by %c255_i32 dim 1 : vector<16x256xf32>, i32 -> vector<16x256xf32>
    %c15_i32_5 = arith.constant 15 : i32
    %22 = tpu.dynamic_rotate %1 by %c15_i32_5 dim 1 : vector<16x256xf32>, i32 -> vector<16x256xf32>
    %23 = arith.select %20, %21, %22 : vector<16x256xi1>, vector<16x256xf32>
    %c0_6 = arith.constant 0 : index
    %c0_7 = arith.constant 0 : index
    %c0_8 = arith.constant 0 : index
    %24 = vector.load %arg3[%c0_6, %c0_7, %c0_8] : memref<1x16x1280xf32, #tpu.memory_space<vmem>>, vector<1x16x256xf32>
    %25 = vector.shape_cast %24 : vector<1x16x256xf32> to vector<16x256xf32>
    %26 = vector.shape_cast %23 : vector<16x256xf32> to vector<1x16x256xf32>
    tpu.vector_store %arg3[%c0_6, %c0_7, %c0_8], %26 {strides = array<i32>} : memref<1x16x1280xf32, #tpu.memory_space<vmem>>, vector<1x16x256xf32>,
    %c0_9 = arith.constant 0 : index
    %c0_10 = arith.constant 0 : index
    %c256 = arith.constant 256 : index
    %27 = vector.load %arg2[%c0_9, %c0_10, %c256] : memref<1x16x1280xf32, #tpu.memory_space<vmem>>, vector<1x16x256xf32>
    %28 = vector.shape_cast %27 : vector<1x16x256xf32> to vector<16x256xf32>
    %c1_i32_11 = arith.constant 1 : i32
    %29 = vector.broadcast %c1_i32_11 : i32 to vector<16x256xi32>
    %30 = arith.cmpi sge, %18, %29 : vector<16x256xi32>
    %c1_i32_12 = arith.constant 1 : i32
    %31 = tpu.dynamic_rotate %28 by %c1_i32_12 dim 1 : vector<16x256xf32>, i32 -> vector<16x256xf32>
    %c241_i32 = arith.constant 241 : i32
    %32 = tpu.dynamic_rotate %28 by %c241_i32 dim 1 : vector<16x256xf32>, i32 -> vector<16x256xf32>
    %33 = arith.select %30, %31, %32 : vector<16x256xi1>, vector<16x256xf32>
    %c0_13 = arith.constant 0 : index
    %c0_14 = arith.constant 0 : index
    %c256_15 = arith.constant 256 : index
    %34 = vector.load %arg3[%c0_13, %c0_14, %c256_15] : memref<1x16x1280xf32, #tpu.memory_space<vmem>>, vector<1x16x256xf32>
    %35 = vector.shape_cast %34 : vector<1x16x256xf32> to vector<16x256xf32>
    %36 = vector.shape_cast %33 : vector<16x256xf32> to vector<1x16x256xf32>
    tpu.vector_store %arg3[%c0_13, %c0_14, %c256_15], %36 {strides = array<i32>} : memref<1x16x1280xf32, #tpu.memory_space<vmem>>, vector<1x16x256xf32>,
    %c0_16 = arith.constant 0 : index
    %c0_17 = arith.constant 0 : index
    %c512 = arith.constant 512 : index
    %37 = vector.load %arg2[%c0_16, %c0_17, %c512] : memref<1x16x1280xf32, #tpu.memory_space<vmem>>, vector<1x16x256xf32>
    %38 = vector.shape_cast %37 : vector<1x16x256xf32> to vector<16x256xf32>
    %c240_i32 = arith.constant 240 : i32
    %39 = tpu.dynamic_rotate %38 by %c240_i32 dim 1 : vector<16x256xf32>, i32 -> vector<16x256xf32>
    %c0_18 = arith.constant 0 : index
    %c0_19 = arith.constant 0 : index
    %c512_20 = arith.constant 512 : index
    %40 = vector.load %arg3[%c0_18, %c0_19, %c512_20] : memref<1x16x1280xf32, #tpu.memory_space<vmem>>, vector<1x16x256xf32>
    %41 = vector.shape_cast %40 : vector<1x16x256xf32> to vector<16x256xf32>
    %42 = vector.shape_cast %39 : vector<16x256xf32> to vector<1x16x256xf32>
    tpu.vector_store %arg3[%c0_18, %c0_19, %c512_20], %42 {strides = array<i32>} : memref<1x16x1280xf32, #tpu.memory_space<vmem>>, vector<1x16x256xf32>,
    %c0_21 = arith.constant 0 : index
    %c0_22 = arith.constant 0 : index
    %c768 = arith.constant 768 : index
    %43 = vector.load %arg2[%c0_21, %c0_22, %c768] : memref<1x16x1280xf32, #tpu.memory_space<vmem>>, vector<1x16x256xf32>
    %44 = vector.shape_cast %43 : vector<1x16x256xf32> to vector<16x256xf32>
    %c16_i32_23 = arith.constant 16 : i32
    %45 = tpu.dynamic_rotate %44 by %c16_i32_23 dim 1 : vector<16x256xf32>, i32 -> vector<16x256xf32>
    %c0_24 = arith.constant 0 : index
    %c0_25 = arith.constant 0 : index
    %c768_26 = arith.constant 768 : index
    %46 = vector.load %arg3[%c0_24, %c0_25, %c768_26] : memref<1x16x1280xf32, #tpu.memory_space<vmem>>, vector<1x16x256xf32>
    %47 = vector.shape_cast %46 : vector<1x16x256xf32> to vector<16x256xf32>
    %48 = vector.shape_cast %45 : vector<16x256xf32> to vector<1x16x256xf32>
    tpu.vector_store %arg3[%c0_24, %c0_25, %c768_26], %48 {strides = array<i32>} : memref<1x16x1280xf32, #tpu.memory_space<vmem>>, vector<1x16x256xf32>,
    %c0_27 = arith.constant 0 : index
    %c0_28 = arith.constant 0 : index
    %c1024 = arith.constant 1024 : index
    %49 = vector.load %arg2[%c0_27, %c0_28, %c1024] : memref<1x16x1280xf32, #tpu.memory_space<vmem>>, vector<1x16x256xf32>
    %50 = vector.shape_cast %49 : vector<1x16x256xf32> to vector<16x256xf32>
    %c0_29 = arith.constant 0 : index
    %c0_30 = arith.constant 0 : index
    %c1024_31 = arith.constant 1024 : index
    %51 = vector.load %arg3[%c0_29, %c0_30, %c1024_31] : memref<1x16x1280xf32, #tpu.memory_space<vmem>>, vector<1x16x256xf32>
    %52 = vector.shape_cast %51 : vector<1x16x256xf32> to vector<16x256xf32>
    %53 = vector.shape_cast %50 : vector<16x256xf32> to vector<1x16x256xf32>
    tpu.vector_store %arg3[%c0_29, %c0_30, %c1024_31], %53 {strides = array<i32>} : memref<1x16x1280xf32, #tpu.memory_space<vmem>>, vector<1x16x256xf32>,
    return
  }
  func.func @transform_0(%arg0: i32, %arg1: i32) -> (i32, i32, i32) {
    %c0_i32 = arith.constant 0 : i32
    %c0_i32_0 = arith.constant 0 : i32
    return %arg0, %arg1, %c0_i32 : i32, i32, i32
  }
  func.func @transform_1(%arg0: i32, %arg1: i32) -> (i32, i32, i32) {
    %c0_i32 = arith.constant 0 : i32
    %c0_i32_0 = arith.constant 0 : i32
    return %arg0, %arg1, %c0_i32 : i32, i32, i32
  }
}

</mosaic_0001>

<llo_original>
// kernel: lem_forward.1
$region0: #{lem_forward.1}
  #allocation0 [shape = 'u32[]', space=smem, size = 0x4, offset = 0x4, fixed_abs, tag = 'smem constant byte address 0x4 - core index']
  #allocation1 [shape = 'u32[144,128]{1,0:T(1,128)}', space=vmem, size = 0x12000, scoped, tag = 'internal scratch']
  %s0 = inlined_call_operand.hbm [shape: f32[2,16,1280], index: 0, kind: input, shape index: {}]
  %s1 = inlined_call_operand.hbm [shape: f32[2,16,1280], index: 1, kind: output, shape index: {}]
  %s2 = sld [smem:[#allocation0]]
  $region41: #{lem_forward.1} parent=0
    _
  %s4 = ssub.s32 1, %s2
  %s5 = scalar_select 0, %s4, %s2
  $region1: #{lem_forward.1} parent=0
    #allocation2 [shape = 'u8[163840]{0}', space=vmem, size = 0x28000, scoped, tag = 'input window, operand 0']
    #allocation3 [shape = 's32[2]{0}', space=sflag, size = 0x8, scoped, tag = 'scoped memory for lem_forward.1']
    #allocation4 [shape = 's32[2]{0}', space=sflag, size = 0x8, scoped, tag = 'scoped memory for lem_forward.1']
    #allocation5 [shape = 'u8[163840]{0}', space=vmem, size = 0x28000, scoped, tag = 'output window, operand 0']
    %6 = vsyncpa [#allocation3], 0
    %s7 = scalar_lea.sflag [#allocation3], 1
    %8 = vsyncpa %s7, 0
    %9 = vsyncpa [#allocation4], 0
    %s10 = scalar_lea.sflag [#allocation4], 1
    %11 = vsyncpa %s10, 0
    loop: start=0, step=1, limit=4
    $region2: #{lem_forward.1} parent=1 // loop_pre_header
      _
    $region3: #{lem_forward.1} parent=1 // loop_header
      %s13 = sphi 0, %s17
      %p14 = scmp.ge.s32.totalorder %s13, 4
      %s20 = sphi 0, %s32
      %s21 = sphi 0, %s28
      %s22 = sphi 0, %s20
      %s23 = sphi 0, %s21
      %s24 = sphi 0, %s22
      %s25 = sphi 0, %s23
      %s37 = sphi 0, %s39
      %s40 = sphi 0, %s37
      %s41 = sphi 0, %s40
      %s57 = sphi 0, %s41
      %s65 = sphi 0, %s67
      %s68 = sphi 0, %s65
      %s69 = sphi 0, %s68
      %s85 = sphi 0, %s69
    $region4: #{lem_forward.1} parent=1 // loop_header_branch
      %16 = sbr.rel (%p14) target = $region8
    $region5: #{lem_forward.1} parent=1 // loop_body
      %s18 = ssub.s32 %s13, 1
      %s19 = ssub.s32 %s13, 2
      %s26 = sadd.s32 1, %s21
      %p27 = scmp.ge.s32.totalorder %s26, 1
      %s28 = scalar_select %p27, 0, %s26
      %s29 = sadd.s32 1, %s20
      %s30 = scalar_select %p27, %s29, %s20
      %p31 = scmp.ge.s32.totalorder %s30, 2
      %s32 = scalar_select %p31, 0, %s30
      %s33 = ssub.s32 %s20, %s32
      %s34 = ssub.s32 %s21, %s28
      %s35 = sor.u32 %s33, %s34
      %p36 = scmp.eq.s32.totalorder %s35, 0
      %s38 = sadd.s32 %s37, 1
      %s39 = scalar_select %p36, %s37, %s38
      %p42 = pneg %p36
      %p43 = scmp.eq.s32.totalorder %s13, 1
      %p44 = por %p42, %p43
      %p45 = scmp.ne.s32.totalorder %s37, %s40
      %p46 = scmp.eq.s32.totalorder %s13, 0
      %p47 = por %p45, %p46
      %p48 = scmp.ne.s32.totalorder %s37, %s40
      %p49 = scmp.eq.s32.totalorder %s18, 1
      %p50 = por %p48, %p49
      %p51 = scmp.ne.s32.totalorder %s40, %s41
      %p52 = scmp.eq.s32.totalorder %s18, 0
      %p53 = por %p51, %p52
      %p54 = scmp.ne.s32.totalorder %s40, %s41
      %p55 = scmp.eq.s32.totalorder %s19, 1
      %p56 = por %p54, %p55
      %p58 = scmp.ne.s32.totalorder %s41, %s57
      %p59 = scmp.eq.s32.totalorder %s19, 0
      %p60 = por %p58, %p59
      %s61 = ssub.s32 %s20, %s32
      %s62 = ssub.s32 %s21, %s28
      %s63 = sor.u32 %s61, %s62
      %p64 = scmp.eq.s32.totalorder %s63, 0
      %s66 = sadd.s32 %s65, 1
      %s67 = scalar_select %p64, %s65, %s66
      %p70 = pneg %p64
      %p71 = scmp.eq.s32.totalorder %s13, 1
      %p72 = por %p70, %p71
      %p73 = scmp.ne.s32.totalorder %s65, %s68
      %p74 = scmp.eq.s32.totalorder %s13, 0
      %p75 = por %p73, %p74
      %p76 = scmp.ne.s32.totalorder %s65, %s68
      %p77 = scmp.eq.s32.totalorder %s18, 1
      %p78 = por %p76, %p77
      %p79 = scmp.ne.s32.totalorder %s68, %s69
      %p80 = scmp.eq.s32.totalorder %s18, 0
      %p81 = por %p79, %p80
      %p82 = scmp.ne.s32.totalorder %s68, %s69
      %p83 = scmp.eq.s32.totalorder %s19, 1
      %p84 = por %p82, %p83
      %p86 = scmp.ne.s32.totalorder %s69, %s85
      %p87 = scmp.eq.s32.totalorder %s19, 0
      %p88 = por %p86, %p87
      %p89 = scmp.le.s32.totalorder 1, %s13
      %p90 = scmp.lt.s32.totalorder %s13, 3
      %p91 = pnand %p89, %p90
      %p92 = pneg %p91
      // Predicated region
      $region9: #{lem_forward.1} parent=5 // pred_check
        _
      $region10: #{lem_forward.1} parent=5 // pred_check_branch
        %94 = sbr.rel (%p91) target = $region12
      $region11: #{lem_forward.1} parent=5 // pred_region
        %s95 = ssub.s32 %s13, 1
      $region12: #{lem_forward.1} parent=5 // pred_fallthru
        _
      %p96 = scmp.lt.s32.totalorder %s13, 2
      // Predicated region
      $region13: #{lem_forward.1} parent=5 // pred_check
        %p97 = pneg %p96
      $region14: #{lem_forward.1} parent=5 // pred_check_branch
        %99 = sbr.rel (%p97) target = $region16
      $region15: #{lem_forward.1} parent=5 // pred_region
        // Predicated region
        $region17: #{lem_forward.1} parent=15 // pred_check
          %p100 = pneg %p47
        $region18: #{lem_forward.1} parent=15 // pred_check_branch
          %102 = sbr.rel (%p100) target = $region20
        $region19: #{lem_forward.1} parent=15 // pred_region
          %s103 = sand.u32 %s37, 1
          %s104 = scalar_lea.sflag [#allocation3], %s103
          %s105 = sand.u32 %s37, 1
          %s106 = smul.addr %s105, 160
          %s107 = scalar_lea.vmem [#allocation2], %s106
          %s108 = smul.u32 2, %s21
          %s110 = ssub.s32 2560, 2560
          %111 = vsyncadd %s104, %s110
          %s112 = smul.addr %s108, 10
          %s113 = smul.addr %s20, 20
          %s114 = sadd.s32 %s112, %s113
          %s115 = smul.addr %s114, 128
          %s116 = scalar_lea.hbm %s0, %s115
          %s117 = sshll.u32 %s107, 4
          %s118 = int_to_ptr.vmem [resolvable:$true] %s117
          %123 = dma.hbm_to_vmem [thread:$0]  %s116, 2560, %s118, %s104, 1280, 1280, 80
        $region20: #{lem_forward.1} parent=15 // pred_fallthru
          _
      $region16: #{lem_forward.1} parent=5 // pred_fallthru
        _
      %p124 = scmp.le.s32.totalorder 1, %s13
      %p125 = scmp.lt.s32.totalorder %s13, 3
      %p126 = pnand %p124, %p125
      %p127 = pneg %p126
      // Predicated region
      $region21: #{lem_forward.1} parent=5 // pred_check
        _
      $region22: #{lem_forward.1} parent=5 // pred_check_branch
        %129 = sbr.rel (%p126) target = $region24
      $region23: #{lem_forward.1} parent=5 // pred_region
        %s130 = ssub.s32 %s13, 1
        %s131 = sand.u32 %s40, 1
        %s132 = scalar_lea.sflag [#allocation3], %s131
        %s133 = sand.u32 %s40, 1
        %s134 = smul.addr %s133, 160
        %s135 = scalar_lea.vmem [#allocation2], %s134
        // Predicated region
        $region25: #{lem_forward.1} parent=23 // pred_check
          %p136 = pneg %p53
        $region26: #{lem_forward.1} parent=23 // pred_check_branch
          %138 = sbr.rel (%p136) target = $region28
        $region27: #{lem_forward.1} parent=23 // pred_region
          %139 = dma.done %s132, 2560
        $region28: #{lem_forward.1} parent=23 // pred_fallthru
          _
        %s140 = sand.u32 %s40, 1
        %s141 = scalar_lea.sflag [#allocation3], %s140
        %s142 = sand.u32 %s40, 1
        %s143 = smul.addr %s142, 160
        %s144 = scalar_lea.vmem [#allocation2], %s143
        %p145 = pneg %p53
        %p146 = pneg %p50
        %p147 = pneg %p81
        %p148 = pneg %p78
        %s149 = sand.u32 %s68, 1
        %s150 = scalar_lea.sflag [#allocation4], %s149
        %s151 = sand.u32 %s68, 1
        %s152 = smul.addr %s151, 160
        %s153 = scalar_lea.vmem [#allocation5], %s152
        %s154 = smul.u32 2, %s23
        %s155 = smul.u32 2, %s23
        %v156 = vld [vmem:[%s135] sm:$0xff]
        %v157 = vld [vmem:[%s135 + $0x8] sm:$0xff]
        %v158 = vld [vmem:[%s135 + $0x50] sm:$0xff]
        %v159 = vld [vmem:[%s135 + $0x58] sm:$0xff]
        %v160 = vlaneseq
        %v161 = vand.u32 %v160, 127
        %v162 = vadd.s32 %v161, 128
        %vm163 = vcmp.lt.s32.totalorder %v161, 0
        %v164 = vsub.s32 0, %v161
        %v165 = vsel %vm163, %v164, %v161
        %v166 = vshrl.u32 %v165, 4
        %v167 = vand.u32 %v165, 15
        %v168 = vsub.s32 0, %v167
        %v169 = vsel %vm163, %v168, %v167
        %vm170 = vcmp.lt.s32.totalorder %v162, 0
        %v171 = vsub.s32 0, %v162
        %v172 = vsel %vm170, %v171, %v162
        %v173 = vshrl.u32 %v172, 4
        %v174 = vand.u32 %v172, 15
        %v175 = vsub.s32 0, %v174
        %v176 = vsel %vm170, %v175, %v174
        %vm177 = vcmp.ne.s32.totalorder %v169, 0
        %vm178 = vcmp.ne.s32.totalorder %v176, 0
        %vm179 = vcmp.lt.s32.totalorder %v169, 0
        %vm180 = vcmp.lt.s32.totalorder %v176, 0
        %vm181 = vmand %vm179, %vm177
        %vm182 = vmand %vm180, %vm178
        %v183 = vadd.s32 %v169, 16
        %v184 = vadd.s32 %v176, 16
        %v185 = vsel %vm181, %v183, %v169
        %v186 = vsel %vm182, %v184, %v176
        %vm187 = vcmp.lt.s32.totalorder %v185, 15
        %vm188 = vcmp.lt.s32.totalorder %v186, 15
        %189 = vrot.lane.b32.xlu0 %v156, 127
        %v190 = vpop.permute.xlu0 %189
        %191 = vrot.lane.b32.xlu0 %v158, 127
        %v192 = vpop.permute.xlu0 %191
        %193 = vrot.lane.b32.xlu0 %v157, 127
        %v194 = vpop.permute.xlu0 %193
        %195 = vrot.lane.b32.xlu0 %v159, 127
        %v196 = vpop.permute.xlu0 %195
        %vm197 = vcmp.lt.s32.totalorder %v161, 127
        %v198 = vsel %vm197, %v190, %v194
        %v199 = vsel %vm197, %v192, %v196
        %v200 = vsel %vm197, %v194, %v190
        %v201 = vsel %vm197, %v196, %v192
        %202 = vrot.lane.b32.xlu0 %v156, 15
        %v203 = vpop.permute.xlu0 %202
        %204 = vrot.lane.b32.xlu0 %v158, 15
        %v205 = vpop.permute.xlu0 %204
        %206 = vrot.lane.b32.xlu0 %v157, 15
        %v207 = vpop.permute.xlu0 %206
        %208 = vrot.lane.b32.xlu0 %v159, 15
        %v209 = vpop.permute.xlu0 %208
        %vm210 = vcmp.lt.s32.totalorder %v161, 15
        %v211 = vsel %vm210, %v203, %v207
        %v212 = vsel %vm210, %v205, %v209
        %v213 = vsel %vm210, %v207, %v203
        %v214 = vsel %vm210, %v209, %v205
        %v215 = vsel %vm187, %v198, %v213
        %v216 = vsel %vm188, %v200, %v211
        %v217 = vsel %vm187, %v199, %v214
        %v218 = vsel %vm188, %v201, %v212
        %219 = vst [vmem:[%s153] sm:$0xff] %v215
        %220 = vst [vmem:[%s153 + $0x8] sm:$0xff] %v216
        %221 = vst [vmem:[%s153 + $0x50] sm:$0xff] %v217
        %222 = vst [vmem:[%s153 + $0x58] sm:$0xff] %v218
        %v223 = vld [vmem:[%s135 + $0x10] sm:$0xff]
        %v224 = vld [vmem:[%s135 + $0x18] sm:$0xff]
        %v225 = vld [vmem:[%s135 + $0x60] sm:$0xff]
        %v226 = vld [vmem:[%s135 + $0x68] sm:$0xff]
        %vm227 = vcmp.ge.s32.totalorder %v185, 1
        %vm228 = vcmp.ge.s32.totalorder %v186, 1
        %229 = vrot.lane.b32.xlu0 %v223, 1
        %v230 = vpop.permute.xlu0 %229
        %231 = vrot.lane.b32.xlu0 %v225, 1
        %v232 = vpop.permute.xlu0 %231
        %233 = vrot.lane.b32.xlu0 %v224, 1
        %v234 = vpop.permute.xlu0 %233
        %235 = vrot.lane.b32.xlu0 %v226, 1
        %v236 = vpop.permute.xlu0 %235
        %vm237 = vcmp.lt.s32.totalorder %v161, 1
        %v238 = vsel %vm237, %v230, %v234
        %v239 = vsel %vm237, %v232, %v236
        %v240 = vsel %vm237, %v234, %v230
        %v241 = vsel %vm237, %v236, %v232
        %242 = vrot.lane.b32.xlu0 %v223, 113
        %v243 = vpop.permute.xlu0 %242
        %244 = vrot.lane.b32.xlu0 %v225, 113
        %v245 = vpop.permute.xlu0 %244
        %246 = vrot.lane.b32.xlu0 %v224, 113
        %v247 = vpop.permute.xlu0 %246
        %248 = vrot.lane.b32.xlu0 %v226, 113
        %v249 = vpop.permute.xlu0 %248
        %vm250 = vcmp.lt.s32.totalorder %v161, 113
        %v251 = vsel %vm250, %v243, %v247
        %v252 = vsel %vm250, %v245, %v249
        %v253 = vsel %vm250, %v247, %v243
        %v254 = vsel %vm250, %v249, %v245
        %v255 = vsel %vm227, %v240, %v251
        %v256 = vsel %vm228, %v238, %v253
        %v257 = vsel %vm227, %v241, %v252
        %v258 = vsel %vm228, %v239, %v254
        %259 = vst [vmem:[%s153 + $0x10] sm:$0xff] %v255
        %260 = vst [vmem:[%s153 + $0x18] sm:$0xff] %v256
        %261 = vst [vmem:[%s153 + $0x60] sm:$0xff] %v257
        %262 = vst [vmem:[%s153 + $0x68] sm:$0xff] %v258
        %v263 = vld [vmem:[%s135 + $0x20] sm:$0xff]
        %v264 = vld [vmem:[%s135 + $0x28] sm:$0xff]
        %v265 = vld [vmem:[%s135 + $0x70] sm:$0xff]
        %v266 = vld [vmem:[%s135 + $0x78] sm:$0xff]
        %267 = vrot.lane.b32.xlu0 %v263, 112
        %v268 = vpop.permute.xlu0 %267
        %269 = vrot.lane.b32.xlu0 %v265, 112
        %v270 = vpop.permute.xlu0 %269
        %271 = vrot.lane.b32.xlu0 %v264, 112
        %v272 = vpop.permute.xlu0 %271
        %273 = vrot.lane.b32.xlu0 %v266, 112
        %v274 = vpop.permute.xlu0 %273
        %vm275 = vcmp.lt.s32.totalorder %v161, 112
        %v276 = vsel %vm275, %v268, %v272
        %v277 = vsel %vm275, %v270, %v274
        %v278 = vsel %vm275, %v272, %v268
        %v279 = vsel %vm275, %v274, %v270
        %280 = vst [vmem:[%s153 + $0x20] sm:$0xff] %v276
        %281 = vst [vmem:[%s153 + $0x28] sm:$0xff] %v278
        %282 = vst [vmem:[%s153 + $0x70] sm:$0xff] %v277
        %283 = vst [vmem:[%s153 + $0x78] sm:$0xff] %v279
        %v284 = vld [vmem:[%s135 + $0x30] sm:$0xff]
        %v285 = vld [vmem:[%s135 + $0x38] sm:$0xff]
        %v286 = vld [vmem:[%s135 + $0x80] sm:$0xff]
        %v287 = vld [vmem:[%s135 + $0x88] sm:$0xff]
        %288 = vrot.lane.b32.xlu0 %v284, 16
        %v289 = vpop.permute.xlu0 %288
        %290 = vrot.lane.b32.xlu0 %v286, 16
        %v291 = vpop.permute.xlu0 %290
        %292 = vrot.lane.b32.xlu0 %v285, 16
        %v293 = vpop.permute.xlu0 %292
        %294 = vrot.lane.b32.xlu0 %v287, 16
        %v295 = vpop.permute.xlu0 %294
        %vm296 = vcmp.lt.s32.totalorder %v161, 16
        %v297 = vsel %vm296, %v289, %v293
        %v298 = vsel %vm296, %v291, %v295
        %v299 = vsel %vm296, %v293, %v289
        %v300 = vsel %vm296, %v295, %v291
        %301 = vst [vmem:[%s153 + $0x30] sm:$0xff] %v299
        %302 = vst [vmem:[%s153 + $0x38] sm:$0xff] %v297
        %303 = vst [vmem:[%s153 + $0x80] sm:$0xff] %v300
        %304 = vst [vmem:[%s153 + $0x88] sm:$0xff] %v298
        %v305 = vld [vmem:[%s135 + $0x40] sm:$0xff]
        %v306 = vld [vmem:[%s135 + $0x48] sm:$0xff]
        %v307 = vld [vmem:[%s135 + $0x90] sm:$0xff]
        %v308 = vld [vmem:[%s135 + $0x98] sm:$0xff]
        %309 = vst [vmem:[%s153 + $0x40] sm:$0xff] %v305
        %310 = vst [vmem:[%s153 + $0x48] sm:$0xff] %v306
        %311 = vst [vmem:[%s153 + $0x90] sm:$0xff] %v307
        %312 = vst [vmem:[%s153 + $0x98] sm:$0xff] %v308
        %s313 = sand.u32 %s68, 1
        %s314 = scalar_lea.sflag [#allocation4], %s313
        %s315 = sand.u32 %s68, 1
        %s316 = smul.addr %s315, 160
        %s317 = scalar_lea.vmem [#allocation5], %s316
        // Predicated region
        $region29: #{lem_forward.1} parent=23 // pred_check
          %p318 = pneg %p78
        $region30: #{lem_forward.1} parent=23 // pred_check_branch
          %320 = sbr.rel (%p318) target = $region32
        $region31: #{lem_forward.1} parent=23 // pred_region
          %s321 = smul.u32 2, %s23
          %s323 = ssub.s32 2560, 2560
          %324 = vsyncadd %s314, %s323
          %s325 = smul.addr %s321, 10
          %s326 = smul.addr %s22, 20
          %s327 = sadd.s32 %s325, %s326
          %s328 = smul.addr %s327, 128
          %s329 = scalar_lea.hbm %s1, %s328
          %s330 = sshll.u32 %s317, 4
          %s331 = int_to_ptr.vmem [resolvable:$true] %s330
          %336 = dma.vmem_to_hbm [thread:$0]  %s331, 2560, %s329, %s314, 1280, 1280, 80
        $region32: #{lem_forward.1} parent=23 // pred_fallthru
          _
      $region24: #{lem_forward.1} parent=5 // pred_fallthru
        _
      %p337 = scmp.le.s32.totalorder 2, %s13
      // Predicated region
      $region33: #{lem_forward.1} parent=5 // pred_check
        %p338 = pneg %p337
      $region34: #{lem_forward.1} parent=5 // pred_check_branch
        %340 = sbr.rel (%p338) target = $region36
      $region35: #{lem_forward.1} parent=5 // pred_region
        %s341 = ssub.s32 %s13, 2
        // Predicated region
        $region37: #{lem_forward.1} parent=35 // pred_check
          %p342 = pneg %p84
        $region38: #{lem_forward.1} parent=35 // pred_check_branch
          %344 = sbr.rel (%p342) target = $region40
        $region39: #{lem_forward.1} parent=35 // pred_region
          %s345 = sand.u32 %s69, 1
          %s346 = scalar_lea.sflag [#allocation4], %s345
          %s347 = sand.u32 %s69, 1
          %s348 = smul.addr %s347, 160
          %s349 = scalar_lea.vmem [#allocation5], %s348
          %350 = dma.done %s346, 2560
        $region40: #{lem_forward.1} parent=35 // pred_fallthru
          _
      $region36: #{lem_forward.1} parent=5 // pred_fallthru
        _
    $region6: #{lem_forward.1} parent=1 // loop_footer
      %s17 = sadd.s32 1, %s13
    $region7: #{lem_forward.1} parent=1 // loop_footer_branch
      %12 = sbr.rel target = $region3
    $region8: #{lem_forward.1} parent=1 // loop_exit
      _
    %351 = vsyncpa [#allocation3], 1
    %s352 = scalar_lea.sflag [#allocation3], 1
    %353 = vsyncpa %s352, 1
    %354 = vsyncpa [#allocation4], 1
    %s355 = scalar_lea.sflag [#allocation4], 1
    %356 = vsyncpa %s355, 1

</llo_original>
